<compile_context>
chip_gen: v7x
topology: tpu7x:2x2x1
jax: 0.10.0
libtpu: 0.0.40
codegen_flags: <defaults>
</compile_context>

<pallas_src>
import jax
import jax.numpy as jnp
from jax.experimental import pallas as pl
from jax.experimental.pallas import tpu as pltpu


def _sublane_align(itemsize):
    # Rows per packed vreg sublane group: 8 for 32-bit, 16 for 16-bit, 32 for 8-bit.
    return {4: 8, 2: 16, 1: 32}.get(int(itemsize), 8)


def _choose_tiling(N, H, W, itemsize, target_bytes):
    """Pick (tbc, rpc): planes per block and image rows per HW-chunk.

    Block bytes ~= tbc * rpc * W * itemsize <= target_bytes (modulo the
    sublane-alignment floor on tbc), so VMEM stays bounded for any plane size.
    """
    sub = _sublane_align(itemsize)
    plane_bytes = H * W * itemsize
    if H == 1 or plane_bytes * sub <= target_bytes:
        rpc = H                                   # whole plane in one chunk
    else:
        rpc = None
        for d in range(H - 1, 0, -1):             # largest divisor of H that fits
            if H % d:
                continue
            if d * W * itemsize * sub > target_bytes:
                continue
            if (d * W) % 128:                     # lane alignment for partial blocks
                continue
            rpc = d
            break
        if rpc is None:
            # TODO(synk): huge planes whose row size is not 128-lane friendly fall
            # back to one full plane per chunk (may need a larger vmem_limit_bytes).
            rpc = H
    chunk_bytes = rpc * W * itemsize
    raw = max(1, target_bytes // chunk_bytes)
    if raw >= N:
        tbc = N                                   # single (full-dim) plane block
    else:
        tbc = max(sub, (raw // sub) * sub)        # sublane-packing aligned
        if tbc >= N:
            tbc = N
    return tbc, rpc


def _make_tv_kernel(tbc, chunk, W, rpc, N, compute_dtype):
    ragged = (N % tbc) != 0

    def kernel(mask_ref, x_ref, out_ref):
        # mask_ref: (1, chunk) 0/1 column mask (0 where +1 neighbour wraps a row)
        # x_ref   : (tbc, chunk) block of flattened planes
        # out_ref : (1, 1) SMEM partial sum owned by this grid step (no RMW)
        x = x_ref[...].astype(compute_dtype)      # no-op for f32/bf16 inputs
        partial = jnp.zeros((tbc, 1), jnp.float32)
        if W > 1:
            dw = jnp.abs(x[:, : chunk - 1] - x[:, 1:]) * mask_ref[:, : chunk - 1]
            partial = partial + jnp.sum(dw, axis=1, keepdims=True, dtype=jnp.float32)
        if rpc > 1:
            # +W neighbour never crosses a plane or an image-row boundary.
            dv = jnp.abs(x[:, : chunk - W] - x[:, W:])
            partial = partial + jnp.sum(dv, axis=1, keepdims=True, dtype=jnp.float32)
        if ragged:
            # Last plane-block may read past N: mask those rows (select, so any
            # garbage/NaN in the out-of-bounds rows is discarded).
            row = jax.lax.broadcasted_iota(jnp.int32, (tbc, 1), 0)
            valid = (pl.program_id(0) * tbc + row) < N
            partial = jnp.where(valid, partial, 0.0)
        out_ref[0, 0] = jnp.sum(partial)

    return kernel


def tv_loss(x, *, weight=1.0, batch_norm=False, target_block_bytes=4 << 20):
    """Total-variation loss of an NCHW tensor, returned as a scalar."""
    B, C, H, W = x.shape
    N = B * C
    HW = H * W
    itemsize = x.dtype.itemsize
    if x.dtype in (jnp.float32, jnp.bfloat16):
        compute_dtype = x.dtype                   # bf16-native VPU on v6e/v7x
    else:
        compute_dtype = jnp.float32

    x2 = x.reshape(N, HW)                         # contiguous, lane-dense layout

    tbc, rpc = _choose_tiling(N, H, W, itemsize, target_block_bytes)
    chunk = rpc * W
    ncb = H // rpc                                # chunks per plane (exact)
    nrb = pl.cdiv(N, tbc)

    # Give both v7x TensorCores work when the input is big but fits one block.
    sub = _sublane_align(itemsize)
    total_bytes = N * HW * itemsize
    if nrb * ncb == 1 and total_bytes >= (2 << 20) and N >= 2 * sub:
        tbc = max(sub, ((N // 2) // sub) * sub)
        nrb = pl.cdiv(N, tbc)

    # Precomputed 0/1 column mask: zero where the +1 neighbour wraps to the
    # next image row (w == W-1).  Same mask for every chunk (chunk % W == 0).
    col = jnp.arange(chunk, dtype=jnp.int32) % W
    colmask = (col != (W - 1)).astype(compute_dtype).reshape(1, chunk)

    kernel = _make_tv_kernel(tbc, chunk, W, rpc, N, compute_dtype)
    cost = pl.CostEstimate(
        flops=int(6 * N * HW),                    # 2 sub + 2 abs + mask + reduce adds
        transcendentals=0,
        bytes_accessed=int(nrb * tbc * ncb * chunk * itemsize
                           + nrb * ncb * (chunk * itemsize + 4)),
    )

    partials = pl.pallas_call(
        kernel,
        out_shape=jax.ShapeDtypeStruct((nrb, ncb), jnp.float32),
        grid_spec=pltpu.PrefetchScalarGridSpec(
            num_scalar_prefetch=0,
            grid=(nrb, ncb),
            in_specs=[
                pl.BlockSpec((1, chunk), lambda i, j: (0, 0)),       # column mask
                pl.BlockSpec((tbc, chunk), lambda i, j: (i, j)),     # input tile
            ],
            out_specs=pl.BlockSpec(
                (1, 1), lambda i, j: (i, j), memory_space=pltpu.MemorySpace.SMEM
            ),
        ),
        compiler_params=pltpu.CompilerParams(
            # Independent per-block partials -> embarrassingly parallel grid.
            dimension_semantics=("parallel", "parallel"),
            # ~4 MiB input blocks, double-buffered, + diff temporaries: stays
            # well inside this on v5e/v6e (128 MiB phys) and v7x (64 MiB phys).
            vmem_limit_bytes=48 * 1024 * 1024,
        ),
        cost_estimate=cost,
    )(colmask, x2)

    total = jnp.sum(partials)                     # tiny (nrb*ncb,) epilogue reduce

    if ncb > 1:
        # Vertical pairs straddling chunk boundaries (rows k*rpc-1 <-> k*rpc).
        # Tiny: 2*(ncb-1)*N*W elements re-read, ~2/rpc of total traffic.
        x3 = x2.reshape(N, H, W)
        bot = x3[:, rpc - 1 : H - 1 : rpc, :].astype(jnp.float32)
        top = x3[:, rpc : H : rpc, :].astype(jnp.float32)
        total = total + jnp.sum(jnp.abs(bot - top))

    w = weight / B if batch_norm else weight
    return (w * total).astype(x.dtype)


def tv_loss_ref(x, *, weight=1.0, batch_norm=False):
    """Pure-JAX reference mirroring the PyTorch module."""
    cdim = jnp.abs(x[:, :, :-1, :] - x[:, :, 1:, :]).sum()
    rdim = jnp.abs(x[:, :, :, :-1] - x[:, :, :, 1:]).sum()
    w = weight / x.shape[0] if batch_norm else weight
    return (w * (cdim + rdim)).astype(x.dtype)


if __name__ == "__main__":
    key = jax.random.PRNGKey(0)
    B, C, H, W = 2, 4, 16, 16
    x = jax.random.normal(key, (B, C, H, W), dtype=jnp.float32)

    out = jax.block_until_ready(tv_loss(x))
    ref = jax.block_until_ready(tv_loss_ref(x))
    assert out.shape == (), f"expected scalar, got {out.shape}"
    assert jnp.allclose(out, ref, rtol=1e-5, atol=1e-4), (out, ref)

    # Exercise the HW-chunked + ragged-N + seam paths at a small size by
    # shrinking the per-block byte target (pure tiling knob, same math).
    x_big = jax.random.normal(jax.random.PRNGKey(1), (3, 5, 32, 32), jnp.float32)
    out2 = jax.block_until_ready(tv_loss(x_big, target_block_bytes=16 * 1024))
    ref2 = jax.block_until_ready(tv_loss_ref(x_big))
    assert jnp.allclose(out2, ref2, rtol=1e-5, atol=1e-4), (out2, ref2)

    print("KERNEL_OK")
</pallas_src>

<mosaic_0001>
module attributes {stable_mosaic.version = 11 : i64} {
  func.func @kernel(%arg0: i32, %arg1: i32, %arg2: memref<1x256xf32, #tpu.memory_space<vmem>>, %arg3: memref<8x256xf32, #tpu.memory_space<vmem>>, %arg4: memref<1x1xf32, #tpu.memory_space<smem>>) attributes {dimension_semantics = [#tpu.dimension_semantics<parallel>, #tpu.dimension_semantics<parallel>], iteration_bounds = array<i64: 1, 1>, scalar_prefetch = 0 : i64, scratch_operands = 0 : i64, tpu.core_type = #tpu.core_type<tc>, window_params = [{pipeline_mode = #tpu.pipeline_mode<synchronous>, transform_indices = @transform_0, window_bounds = array<i64: 1, 256>}, {transform_indices = @transform_1, window_bounds = array<i64: 8, 256>}, {transform_indices = @transform_2, window_bounds = array<i64: 1, 1>}]} {
    %c0 = arith.constant 0 : index
    %c0_0 = arith.constant 0 : index
    %0 = vector.load %arg3[%c0, %c0_0] : memref<8x256xf32, #tpu.memory_space<vmem>>, vector<8x256xf32>
    %cst = arith.constant 0.000000e+00 : f32
    %1 = vector.broadcast %cst : f32 to vector<8x1xf32>
    %2 = vector.extract_strided_slice %0 {offsets = [0, 0], sizes = [8, 255], strides = [1, 1]} : vector<8x256xf32> to vector<8x255xf32>
    %3 = vector.extract_strided_slice %0 {offsets = [0, 1], sizes = [8, 255], strides = [1, 1]} : vector<8x256xf32> to vector<8x255xf32>
    %4 = arith.subf %2, %3 : vector<8x255xf32>
    %5 = math.absf %4 : vector<8x255xf32>
    %c0_1 = arith.constant 0 : index
    %c0_2 = arith.constant 0 : index
    %6 = vector.load %arg2[%c0_1, %c0_2] : memref<1x256xf32, #tpu.memory_space<vmem>>, vector<1x255xf32>
    %7 = vector.broadcast %6 : vector<1x255xf32> to vector<8x255xf32>
    %8 = arith.mulf %5, %7 : vector<8x255xf32>
    %cst_3 = arith.constant dense<0.000000e+00> : vector<8xf32>
    %9 = vector.multi_reduction <add>, %8, %cst_3 [1] : vector<8x255xf32> to vector<8xf32>
    %10 = vector.shape_cast %9 : vector<8xf32> to vector<8x1xf32>
    %11 = arith.addf %1, %10 : vector<8x1xf32>
    %12 = vector.extract_strided_slice %0 {offsets = [0, 0], sizes = [8, 240], strides = [1, 1]} : vector<8x256xf32> to vector<8x240xf32>
    %13 = vector.extract_strided_slice %0 {offsets = [0, 16], sizes = [8, 240], strides = [1, 1]} : vector<8x256xf32> to vector<8x240xf32>
    %14 = arith.subf %12, %13 : vector<8x240xf32>
    %15 = math.absf %14 : vector<8x240xf32>
    %cst_4 = arith.constant dense<0.000000e+00> : vector<8xf32>
    %16 = vector.multi_reduction <add>, %15, %cst_4 [1] : vector<8x240xf32> to vector<8xf32>
    %17 = vector.shape_cast %16 : vector<8xf32> to vector<8x1xf32>
    %18 = arith.addf %11, %17 : vector<8x1xf32>
    %19 = vector.shape_cast %18 : vector<8x1xf32> to vector<1x8x1xf32>
    %cst_5 = arith.constant dense<0.000000e+00> : vector<1xf32>
    %20 = vector.multi_reduction <add>, %19, %cst_5 [1, 2] : vector<1x8x1xf32> to vector<1xf32>
    %21 = vector.shape_cast %20 : vector<1xf32> to vector<1x1x1xf32>
    %22 = vector.extract %21[0, 0, 0] : f32 from vector<1x1x1xf32>
    %c0_6 = arith.constant 0 : index
    %c0_7 = arith.constant 0 : index
    %23 = memref.load %arg4[%c0_6, %c0_7] : memref<1x1xf32, #tpu.memory_space<smem>>
    memref.store %22, %arg4[%c0_6, %c0_7] : memref<1x1xf32, #tpu.memory_space<smem>>
    return
  }
  func.func @transform_0(%arg0: i32, %arg1: i32) -> (i32, i32) {
    %c0_i32 = arith.constant 0 : i32
    %c0_i32_0 = arith.constant 0 : i32
    %c0_i32_1 = arith.constant 0 : i32
    return %c0_i32, %c0_i32_0 : i32, i32
  }
  func.func @transform_1(%arg0: i32, %arg1: i32) -> (i32, i32) {
    %c0_i32 = arith.constant 0 : i32
    return %arg0, %arg1 : i32, i32
  }
  func.func @transform_2(%arg0: i32, %arg1: i32) -> (i32, i32) {
    %c0_i32 = arith.constant 0 : i32
    return %arg0, %arg1 : i32, i32
  }
}

</mosaic_0001>

<llo_original>
// kernel: tpu_custom_call.1
$region0: #{tpu_custom_call.1}
  #allocation0 [shape = 'u32[]', space=smem, size = 0x4, offset = 0x4, fixed_abs, tag = 'smem constant byte address 0x4 - core index']
  #allocation1 [shape = 'u32[144,128]{1,0:T(1,128)}', space=vmem, size = 0x12000, scoped, tag = 'internal scratch']
  %s0 = inlined_call_operand.hbm [shape: f32[1,256], index: 0, kind: input, shape index: {}]
  %s1 = inlined_call_operand.hbm [shape: f32[8,256], index: 1, kind: input, shape index: {}]
  %s2 = inlined_call_operand.hbm [shape: f32[1,1], index: 2, kind: output, shape index: {}]
  %s3 = sld [smem:[#allocation0]]
  $region26: #{tpu_custom_call.1} parent=0
    _
  %s5 = ssub.s32 1, %s3
  %s6 = scalar_select 0, %s5, %s3
  $region1: #{tpu_custom_call.1} parent=0
    #allocation2 [shape = 'u8[1024]{0}', space=vmem, size = 0x400, scoped, tag = 'input window, operand 0, single buffered']
    #allocation3 [shape = 's32[1]{0}', space=sflag, size = 0x4, scoped, tag = 'scoped memory for tpu_custom_call.1']
    #allocation4 [shape = 's32[1]{0}', space=sflag, size = 0x4, scoped, tag = 'scoped memory for tpu_custom_call.1']
    #allocation5 [shape = 'u8[8192]{0}', space=vmem, size = 0x2000, scoped, tag = 'input window, operand 1, single buffered']
    #allocation6 [shape = 's32[1]{0}', space=sflag, size = 0x4, scoped, tag = 'scoped memory for tpu_custom_call.1']
    #allocation7 [shape = 'u8[512]{0}', space=smem, size = 0x200, scoped, tag = 'output window, operand 0, single buffered']
    %7 = vsyncpa [#allocation3], 0
    %8 = vsyncpa [#allocation6], 0
    %9 = vsyncpa [#allocation4], 0
    // Predicated region
    $region2: #{tpu_custom_call.1} parent=1 // pred_check
      _
    $region3: #{tpu_custom_call.1} parent=1 // pred_check_branch
      %11 = sbr.rel (0) target = $region5
    $region4: #{tpu_custom_call.1} parent=1 // pred_region
      %s13 = ssub.s32 32, 32
      %14 = vsyncadd [#allocation3], %s13
      %s16 = sshll.u32 [#allocation2], 4
      %s17 = int_to_ptr.vmem [resolvable:$true] %s16
      %19 = dma.hbm_to_vmem [thread:$0]  %s0, 32, %s17, [#allocation3]
    $region5: #{tpu_custom_call.1} parent=1 // pred_fallthru
      _
    // Predicated region
    $region6: #{tpu_custom_call.1} parent=1 // pred_check
      _
    $region7: #{tpu_custom_call.1} parent=1 // pred_check_branch
      %21 = sbr.rel (0) target = $region9
    $region8: #{tpu_custom_call.1} parent=1 // pred_region
      %s23 = ssub.s32 256, 256
      %24 = vsyncadd [#allocation6], %s23
      %s26 = sshll.u32 [#allocation5], 4
      %s27 = int_to_ptr.vmem [resolvable:$true] %s26
      %29 = dma.hbm_to_vmem [thread:$0]  %s1, 256, %s27, [#allocation6]
    $region9: #{tpu_custom_call.1} parent=1 // pred_fallthru
      _
    // Predicated region
    $region10: #{tpu_custom_call.1} parent=1 // pred_check
      _
    $region11: #{tpu_custom_call.1} parent=1 // pred_check_branch
      %31 = sbr.rel (0) target = $region13
    $region12: #{tpu_custom_call.1} parent=1 // pred_region
      %32 = dma.done [#allocation3], 32
    $region13: #{tpu_custom_call.1} parent=1 // pred_fallthru
      _
    // Predicated region
    $region14: #{tpu_custom_call.1} parent=1 // pred_check
      _
    $region15: #{tpu_custom_call.1} parent=1 // pred_check_branch
      %34 = sbr.rel (0) target = $region17
    $region16: #{tpu_custom_call.1} parent=1 // pred_region
      %35 = dma.done [#allocation6], 256
    $region17: #{tpu_custom_call.1} parent=1 // pred_fallthru
      _
    %v36 = vld [vmem:[#allocation5] sm:$0xff]
    %v37 = vld [vmem:[#allocation5 + $0x8] sm:$0xff]
    %40 = vrot.lane.b32.xlu0 %v36, 127
    %v41 = vpop.permute.xlu0 %40
    %42 = vrot.lane.b32.xlu0 %v37, 127
    %v43 = vpop.permute.xlu0 %42
    %vm44 = vcmask 1039360
    %v45 = vsel %vm44, %v41, %v43
    %v48 = vsub.f32 %v36, %v45
    %v49 = vsub.f32 %v37, %v43
    %v50 = vand.u32 2147483647, %v48
    %v51 = vand.u32 2147483647, %v49
    %v52 = vld [vmem:[#allocation2] sm:$0x3]
    %v54 = vlaneseq
    %v55 = vshrl.u32 %v54, 7
    %v56 = vsub.s32 0, %v55
    %v57 = vrot.slane %v52, %v56
    %v58 = vlaneseq
    %v59 = vshrl.u32 %v58, 7
    %v60 = vsub.s32 1, %v59
    %v61 = vrot.slane %v52, %v60
    %v64 = vmul.f32 %v50, %v57
    %v65 = vmul.f32 %v51, %v61
    %v66 = vsel %vm44, %v65, 0.0
    %v67 = vadd.f32 %v64, %v66
    %68 = vadd.xlane.f32.xlu0 %v67
    %v69 = vpop.xlane.xlu0 %68
    %v70 = vadd.f32 %v69, 0.0
    %71 = vrot.lane.b32.xlu0 %v36, 112
    %v72 = vpop.permute.xlu0 %71
    %73 = vrot.lane.b32.xlu0 %v37, 112
    %v74 = vpop.permute.xlu0 %73
    %vm75 = vcmask 916480
    %v76 = vsel %vm75, %v72, %v74
    %v79 = vsub.f32 %v36, %v76
    %v80 = vsub.f32 %v37, %v74
    %v81 = vand.u32 2147483647, %v79
    %v82 = vand.u32 2147483647, %v80
    %v83 = vsel %vm75, %v82, 0.0
    %v84 = vadd.f32 %v81, %v83
    %85 = vadd.xlane.f32.xlu0 %v84
    %v86 = vpop.xlane.xlu0 %85
    %v87 = vadd.f32 %v70, %v86
    %vm88 = vcmask 7168
    %v89 = vsel %vm88, %v87, 0.0
    %90 = vadd.xlane.f32.xlu0 %v89
    %v91 = vpop.xlane.xlu0 %90
    %v92 = vrot.slane %v91, 4
    %v93 = vadd.f32 %v91, %v92
    %v94 = vrot.slane %v93, 2
    %v95 = vadd.f32 %v93, %v94
    %v96 = vrot.slane %v95, 1
    %v97 = vadd.f32 %v95, %v96
    %s98 = vtos %v97
    %s99 = scalar_lea.smem [#allocation7], 0
    %100 = sst [smem:[%s99]] %s98
    // Predicated region
    $region18: #{tpu_custom_call.1} parent=1 // pred_check
      _
    $region19: #{tpu_custom_call.1} parent=1 // pred_check_branch
      %102 = sbr.rel (0) target = $region21
    $region20: #{tpu_custom_call.1} parent=1 // pred_region
      %s104 = ssub.s32 16, 16
      %105 = vsyncadd [#allocation4], %s104
      %108 = dma.smem_to_hbm [#allocation7], 16, %s2, [#allocation4]
    $region21: #{tpu_custom_call.1} parent=1 // pred_fallthru
      _
    // Predicated region
    $region22: #{tpu_custom_call.1} parent=1 // pred_check
      _
    $region23: #{tpu_custom_call.1} parent=1 // pred_check_branch
      %110 = sbr.rel (0) target = $region25
    $region24: #{tpu_custom_call.1} parent=1 // pred_region
      %111 = dma.done [#allocation4], 16
    $region25: #{tpu_custom_call.1} parent=1 // pred_fallthru
      _
    %112 = sfence
    %113 = vsyncpa [#allocation3], 1
    %114 = vsyncpa [#allocation6], 1
    %115 = vsyncpa [#allocation4], 1

</llo_original>
